<compile_context>
chip_gen: v7x
topology: tpu7x:2x2x1
jax: 0.10.0
libtpu: 0.0.40
codegen_flags: <defaults>
</compile_context>

<pallas_src>
import jax
import jax.numpy as jnp
from jax.experimental import pallas as pl
from jax.experimental.pallas import tpu as pltpu

# ---- L0Dense hard-concrete constants (Louizos et al. defaults) ----
GAMMA = -0.1
ZETA = 1.1

# ---- Actor hyper-parameters ----
MAX_ACTION = 1.0
SCALE_FEATURES = 1.0
DROPRATE_INIT = 0.5

# ---- Kernel tuning ----
MAX_TILE_B = 65_536            # 8*65536*4 B * 2 bufs + out ≈ 4.5 MiB: safe on v5e/v6e/v7x
SMALL_BATCH_PALLAS_THRESHOLD = 2_048   # below this, launch overhead dominates -> pure JAX


def _round_up(n, m):
    return ((n + m - 1) // m) * m


def _select_tile_b(B, max_tile_b=MAX_TILE_B):
    """Largest lane-multiple batch tile that (a) fits the VMEM budget on all chip
    generations, (b) yields >= 2 grid steps when there is enough work (v7x megacore),
    (c) keeps batch-padding waste under ~10%."""
    b128 = _round_up(max(B, 1), 128)
    if b128 <= 256:                          # not enough work for two lane-wide tiles
        return min(b128, max_tile_b)
    tile_b = min(max_tile_b, _round_up((b128 + 1) // 2, 128))
    while tile_b > 128:
        waste = _round_up(B, tile_b) - B
        if waste <= max(0.1 * B, 127):
            break
        tile_b = max(128, (tile_b // 2) // 128 * 128)
    return tile_b


def actor_kernel(xt_ref, w_ref, wb_ref, o_ref):
    """Fused library + gated-linear + tanh head (action_dim == 1).

    xt_ref : (S, TILE_B)  states, batch on the lane axis (lane-dense; f32 or bf16 stream)
    w_ref  : (S, 2)       gate/scale-folded weights: col 0 -> `x` features, col 1 -> `x^2`
    wb_ref : (1, 1) SMEM  gate-folded weight of the constant `1` feature
    o_ref  : (1, TILE_B)  action, lane-dense (unmasked lane-wide stores)

    a[b] = wb + sum_s x[s,b] * (wl[s] + x[s,b] * wq[s])   # VPU mul + XLU sublane reduce
    out  = max_action * tanh(a)                           # EUP
    """
    xt = xt_ref[...].astype(jnp.float32)      # (S, TILE_B); upcast if bf16-streamed
    wl = w_ref[:, 0:1]                        # (S, 1) -> lane-broadcast
    wq = w_ref[:, 1:2]                        # (S, 1)
    a = jnp.sum(xt * (wl + xt * wq), axis=0, keepdims=True) + wb_ref[0, 0]
    o_ref[...] = (MAX_ACTION * jnp.tanh(a)).astype(o_ref.dtype)


def lib_transform(x):
    """Synthetic deterministic feature library: [1, x, x^2] (reference path only).

    # TODO(synk): the real `lib.transform` is an arbitrary external numpy feature library
    # (e.g. PySINDy); replaced by a fixed polynomial library with the same
    # (B, features_dim) output contract.  The folded-weight math below is only valid for
    # this polynomial contract.
    """
    ones = jnp.ones((x.shape[0], 1), dtype=x.dtype)
    return jnp.concatenate([ones, x, x * x], axis=1)


def fold_actor_params(w, qz_loga, state_dim):
    """Fold the eval-mode hard-concrete gate and the 1/scale feature scaling into the
    weights.  Depends only on parameters — do once per parameter update, not per forward."""
    z = jnp.clip(jax.nn.sigmoid(qz_loga) * (ZETA - GAMMA) + GAMMA, 0.0, 1.0)      # (1, F)
    w_eff = w.astype(jnp.float32) * z.astype(jnp.float32).T                       # (F, 1)
    wb = w_eff[0:1, 0:1]                                                          # (1, 1)
    wl = w_eff[1:1 + state_dim, :] * (1.0 / SCALE_FEATURES)                       # (S, 1)
    wq = w_eff[1 + state_dim:1 + 2 * state_dim, :] * (1.0 / SCALE_FEATURES ** 2)  # (S, 1)
    w_poly = jnp.concatenate([wl, wq], axis=1)                                    # (S, 2)
    return w_poly, wb


def _fast_forward(x, w_poly, wb):
    """Pure-JAX small-batch path on the folded weights (XLA fuses it; no kernel launch)."""
    xf = x.astype(jnp.float32)
    a = xf @ w_poly[:, 0] + (xf * xf) @ w_poly[:, 1] + wb[0, 0]
    return (MAX_ACTION * jnp.tanh(a)).reshape(-1, 1)


def actor_forward_lane_dense(xt, w_poly, wb, *, tile_b=None, max_tile_b=MAX_TILE_B):
    """Pallas path on states already in lane-dense (S, b_pad) layout, b_pad % 128 == 0.
    Preferred entry point for large batches: avoids the transpose/pad HBM pass."""
    S, b_pad = xt.shape
    assert b_pad % 128 == 0, "lane-dense input must be padded to a multiple of 128"
    if tile_b is None:
        tile_b = min(max_tile_b, b_pad)
        while b_pad % tile_b != 0:
            tile_b -= 128
    assert b_pad % tile_b == 0

    return pl.pallas_call(
        actor_kernel,
        out_shape=jax.ShapeDtypeStruct((1, b_pad), jnp.float32),
        grid=(b_pad // tile_b,),
        in_specs=[
            pl.BlockSpec((S, tile_b), lambda i: (0, i)),                # streamed per tile
            pl.BlockSpec((S, 2), lambda i: (0, 0)),                     # resident weights
            pl.BlockSpec((1, 1), lambda i: (0, 0),
                         memory_space=pltpu.MemorySpace.SMEM),          # scalar bias weight
        ],
        out_specs=pl.BlockSpec((1, tile_b), lambda i: (0, i)),
        compiler_params=pltpu.CompilerParams(
            dimension_semantics=("parallel",),   # v7x: 2 TensorCores split the batch grid
        ),
    )(xt, w_poly, wb)


def actor_forward(x, w, qz_loga, *, use_pallas=None, stream_bf16=False,
                  max_tile_b=MAX_TILE_B):
    """Full Actor forward on (B, S) states (the PyTorch module's contract)."""
    B, S = x.shape
    F, A = w.shape
    assert A == 1, "VPU-reduce path assumes action_dim == 1 (module default)"
    assert F == 1 + 2 * S, "synthetic library contract is [1, x, x^2]"

    w_poly, wb = fold_actor_params(w, qz_loga, S)

    if use_pallas is None:
        use_pallas = B >= SMALL_BATCH_PALLAS_THRESHOLD
    if not use_pallas:
        return _fast_forward(x, w_poly, wb)

    tile_b = _select_tile_b(B, max_tile_b)
    b_pad = _round_up(B, tile_b)
    in_dtype = jnp.bfloat16 if stream_bf16 else jnp.float32
    # Layout plumbing: batch onto the lane axis.  For peak throughput keep trajectories in
    # (S, B) layout upstream and call actor_forward_lane_dense directly (skips this pass).
    xt = jnp.pad(x.astype(in_dtype).T, ((0, 0), (0, b_pad - B)))                  # (S, b_pad)

    out = actor_forward_lane_dense(xt, w_poly, wb, tile_b=tile_b)
    # (1, b_pad) -> (B, 1): slice off padding; row-major reshape is layout-free.
    return out[:, :B].reshape(B, 1)


def reference_forward(x, w, qz_loga):
    xs = x / SCALE_FEATURES
    xf = lib_transform(xs).astype(jnp.float32)
    z = jnp.clip(jax.nn.sigmoid(qz_loga) * (ZETA - GAMMA) + GAMMA, 0.0, 1.0)
    a = (xf * z) @ w
    return MAX_ACTION * jnp.tanh(a)


if __name__ == "__main__":
    key = jax.random.PRNGKey(0)
    k_x, k_w, k_qz, k_x2 = jax.random.split(key, 4)

    # Small deterministic shapes: state_dim=8 -> features_dim F = 1 + 8 + 8 = 17, action_dim=1
    S, A = 8, 1
    F = 1 + 2 * S

    # Actor.__init__: normal_(weight, mean=0, std=0.01)
    w = 0.01 * jax.random.normal(k_w, (F, A), dtype=jnp.float32)
    # L0Dense qz_loga init: normal(mean=log(1-droprate)-log(droprate), std=1e-2)
    qz_mean = jnp.log(1.0 - DROPRATE_INIT) - jnp.log(DROPRATE_INIT)   # = 0 for droprate 0.5
    qz_loga = qz_mean + 1e-2 * jax.random.normal(k_qz, (1, F), dtype=jnp.float32)

    # 1) small batch, forced through the Pallas kernel (single 128-lane tile)
    x_small = jax.random.normal(k_x, (8, S), dtype=jnp.float32)
    out = jax.block_until_ready(actor_forward(x_small, w, qz_loga, use_pallas=True))
    ref = reference_forward(x_small, w, qz_loga)
    assert out.shape == (8, A)
    assert jnp.allclose(out, ref, atol=1e-5, rtol=1e-5), "pallas (B=8) mismatch"

    # 2) multi-tile grid + batch-padding path (B=384 -> tile 128, grid of 3)
    x_med = jax.random.normal(k_x2, (384, S), dtype=jnp.float32)
    out_med = jax.block_until_ready(actor_forward(x_med, w, qz_loga, use_pallas=True))
    ref_med = reference_forward(x_med, w, qz_loga)
    assert out_med.shape == (384, A)
    assert jnp.allclose(out_med, ref_med, atol=1e-5, rtol=1e-5), "pallas (B=384) mismatch"

    # 3) bf16 input-stream option (v6e/v7x bandwidth win); weights/accumulation stay f32
    out_bf16 = jax.block_until_ready(
        actor_forward(x_med, w, qz_loga, use_pallas=True, stream_bf16=True))
    assert jnp.allclose(out_bf16, ref_med, atol=5e-3, rtol=0.0), "bf16-stream mismatch"

    # 4) auto-dispatch: small batches take the pure-JAX fast path (no kernel launch)
    out_fast = jax.block_until_ready(actor_forward(x_small, w, qz_loga))
    assert jnp.allclose(out_fast, ref, atol=1e-5, rtol=1e-5), "fast-path mismatch"

    print("KERNEL_OK")
</pallas_src>

<mosaic_0001>
module attributes {stable_mosaic.version = 11 : i64} {
  func.func @actor_kernel(%arg0: i32, %arg1: memref<8x128xf32, #tpu.memory_space<vmem>>, %arg2: memref<8x2xf32, #tpu.memory_space<vmem>>, %arg3: memref<1x1xf32, #tpu.memory_space<smem>>, %arg4: memref<1x128xf32, #tpu.memory_space<vmem>>) attributes {dimension_semantics = [#tpu.dimension_semantics<parallel>], iteration_bounds = array<i64: 1>, scalar_prefetch = 0 : i64, scratch_operands = 0 : i64, tpu.core_type = #tpu.core_type<tc>, window_params = [{transform_indices = @transform_0, window_bounds = array<i64: 8, 128>}, {pipeline_mode = #tpu.pipeline_mode<synchronous>, transform_indices = @transform_1, window_bounds = array<i64: 8, 2>}, {transform_indices = @transform_2, window_bounds = array<i64: 1, 1>}, {transform_indices = @transform_3, window_bounds = array<i64: 1, 128>}]} {
    %c0 = arith.constant 0 : index
    %c0_0 = arith.constant 0 : index
    %0 = vector.load %arg1[%c0, %c0_0] : memref<8x128xf32, #tpu.memory_space<vmem>>, vector<8x128xf32>
    %c0_1 = arith.constant 0 : index
    %c0_2 = arith.constant 0 : index
    %1 = vector.load %arg2[%c0_1, %c0_2] : memref<8x2xf32, #tpu.memory_space<vmem>>, vector<8x1xf32>
    %c0_3 = arith.constant 0 : index
    %c1 = arith.constant 1 : index
    %2 = vector.load %arg2[%c0_3, %c1] : memref<8x2xf32, #tpu.memory_space<vmem>>, vector<8x1xf32>
    %3 = vector.broadcast %2 : vector<8x1xf32> to vector<8x128xf32>
    %4 = arith.mulf %0, %3 : vector<8x128xf32>
    %5 = vector.broadcast %1 : vector<8x1xf32> to vector<8x128xf32>
    %6 = arith.addf %5, %4 : vector<8x128xf32>
    %7 = arith.mulf %0, %6 : vector<8x128xf32>
    %cst = arith.constant dense<0.000000e+00> : vector<128xf32>
    %8 = vector.multi_reduction <add>, %7, %cst [0] : vector<8x128xf32> to vector<128xf32>
    %9 = vector.shape_cast %8 : vector<128xf32> to vector<1x128xf32>
    %c0_4 = arith.constant 0 : index
    %c0_5 = arith.constant 0 : index
    %10 = memref.load %arg3[%c0_4, %c0_5] : memref<1x1xf32, #tpu.memory_space<smem>>
    %11 = vector.broadcast %10 : f32 to vector<1x128xf32>
    %12 = arith.addf %9, %11 : vector<1x128xf32>
    %13 = math.tanh %12 : vector<1x128xf32>
    %cst_6 = arith.constant 1.000000e+00 : f32
    %14 = vector.broadcast %cst_6 : f32 to vector<1x128xf32>
    %15 = arith.mulf %14, %13 : vector<1x128xf32>
    %c0_7 = arith.constant 0 : index
    %c0_8 = arith.constant 0 : index
    %16 = vector.load %arg4[%c0_7, %c0_8] : memref<1x128xf32, #tpu.memory_space<vmem>>, vector<1x128xf32>
    tpu.vector_store %arg4[%c0_7, %c0_8], %15 {strides = array<i32>} : memref<1x128xf32, #tpu.memory_space<vmem>>, vector<1x128xf32>,
    return
  }
  func.func @transform_0(%arg0: i32) -> (i32, i32) {
    %c0_i32 = arith.constant 0 : i32
    %c0_i32_0 = arith.constant 0 : i32
    return %c0_i32, %arg0 : i32, i32
  }
  func.func @transform_1(%arg0: i32) -> (i32, i32) {
    %c0_i32 = arith.constant 0 : i32
    %c0_i32_0 = arith.constant 0 : i32
    %c0_i32_1 = arith.constant 0 : i32
    return %c0_i32, %c0_i32_0 : i32, i32
  }
  func.func @transform_2(%arg0: i32) -> (i32, i32) {
    %c0_i32 = arith.constant 0 : i32
    %c0_i32_0 = arith.constant 0 : i32
    %c0_i32_1 = arith.constant 0 : i32
    return %c0_i32, %c0_i32_0 : i32, i32
  }
  func.func @transform_3(%arg0: i32) -> (i32, i32) {
    %c0_i32 = arith.constant 0 : i32
    %c0_i32_0 = arith.constant 0 : i32
    return %c0_i32, %arg0 : i32, i32
  }
}

</mosaic_0001>

<llo_original>
// kernel: tpu_custom_call.1
$region0: #{tpu_custom_call.1}
  #allocation0 [shape = 'u32[]', space=smem, size = 0x4, offset = 0x4, fixed_abs, tag = 'smem constant byte address 0x4 - core index']
  #allocation1 [shape = 'u32[144,128]{1,0:T(1,128)}', space=vmem, size = 0x12000, scoped, tag = 'internal scratch']
  #allocation2 [shape = 'f32[1,1]{1,0:T(1,128)S(6)}', space=smem, size = 0x200, scoped, tag = 'scoped memory for tpu_custom_call.1']
  %s0 = inlined_call_operand.vmem [shape: f32[8,128], index: 0, kind: input, shape index: {}]
  %s1 = inlined_call_operand.vmem [shape: f32[8,2], index: 1, kind: input, shape index: {}]
  %s2 = inlined_call_operand.<no memory space> [shape: f32[1,1], index: 2, kind: input, shape index: {}]
  %s3 = inlined_call_operand.hbm [shape: f32[1,128], index: 3, kind: output, shape index: {}]
  %s4 = sld [smem:[#allocation0]]
  $region22: #{tpu_custom_call.1} parent=0
    _
  %s6 = ssub.s32 1, %s4
  %s7 = scalar_select 0, %s6, %s4
  %8 = sst [smem:[#allocation2]] %s2
  $region1: #{tpu_custom_call.1} parent=0
    #allocation3 [shape = 'u8[512]{0}', space=vmem, size = 0x400, scoped, tag = 'output window, operand 0, single buffered']
    #allocation4 [shape = 's32[1]{0}', space=sflag, size = 0x4, scoped, tag = 'scoped memory for tpu_custom_call.1']
    %9 = vsyncpa [#allocation4], 0
    // Predicated region
    $region2: #{tpu_custom_call.1} parent=1 // pred_check
      _
    $region3: #{tpu_custom_call.1} parent=1 // pred_check_branch
      %11 = sbr.rel (0) target = $region5
    $region4: #{tpu_custom_call.1} parent=1 // pred_region
      _
    $region5: #{tpu_custom_call.1} parent=1 // pred_fallthru
      _
    // Predicated region
    $region6: #{tpu_custom_call.1} parent=1 // pred_check
      _
    $region7: #{tpu_custom_call.1} parent=1 // pred_check_branch
      %13 = sbr.rel (0) target = $region9
    $region8: #{tpu_custom_call.1} parent=1 // pred_region
      _
    $region9: #{tpu_custom_call.1} parent=1 // pred_fallthru
      _
    // Predicated region
    $region10: #{tpu_custom_call.1} parent=1 // pred_check
      _
    $region11: #{tpu_custom_call.1} parent=1 // pred_check_branch
      %15 = sbr.rel (0) target = $region13
    $region12: #{tpu_custom_call.1} parent=1 // pred_region
      _
    $region13: #{tpu_custom_call.1} parent=1 // pred_fallthru
      _
    %v16 = vld [vmem:[%s0] sm:$0xff]
    %v17 = vld [vmem:[%s1] sm:$0xff]
    %19 = vset.pattern.permute.xlu0 1
    %20 = vperm.xlu0 %19, %v17
    %v21 = vpop.permute.xlu0 %20
    %v23 = vmul.f32 %v16, %v21
    %24 = vset.pattern.permute.xlu0 0
    %25 = vperm.xlu0 %24, %v17
    %v26 = vpop.permute.xlu0 %25
    %v28 = vadd.f32 %v26, %v23
    %v29 = vmul.f32 %v16, %v28
    %v30 = vrot.slane %v29, 4
    %v31 = vadd.f32 %v29, %v30
    %v32 = vrot.slane %v31, 2
    %v33 = vadd.f32 %v31, %v32
    %v34 = vrot.slane %v33, 1
    %v35 = vadd.f32 %v33, %v34
    %s36 = sld [smem:[#allocation2]]
    %v37 = vstv %s36
    %v38 = vadd.f32 %v35, %v37
    %v39 = vtanh.pop %v38
    %40 = vst [vmem:[#allocation3] sm:$0x1] %v39
    // Predicated region
    $region14: #{tpu_custom_call.1} parent=1 // pred_check
      _
    $region15: #{tpu_custom_call.1} parent=1 // pred_check_branch
      %42 = sbr.rel (0) target = $region17
    $region16: #{tpu_custom_call.1} parent=1 // pred_region
      %s44 = ssub.s32 16, 16
      %45 = vsyncadd [#allocation4], %s44
      %s47 = sshll.u32 [#allocation3], 4
      %s48 = int_to_ptr.vmem [resolvable:$true] %s47
      %50 = dma.vmem_to_hbm [thread:$0]  %s48, 16, %s3, [#allocation4]
    $region17: #{tpu_custom_call.1} parent=1 // pred_fallthru
      _
    // Predicated region
    $region18: #{tpu_custom_call.1} parent=1 // pred_check
      _
    $region19: #{tpu_custom_call.1} parent=1 // pred_check_branch
      %52 = sbr.rel (0) target = $region21
    $region20: #{tpu_custom_call.1} parent=1 // pred_region
      %53 = dma.done [#allocation4], 16
    $region21: #{tpu_custom_call.1} parent=1 // pred_fallthru
      _
    %54 = vsyncpa [#allocation4], 1

</llo_original>
